<compile_context>
chip_gen: v7x
topology: tpu7x:2x2x1
jax: 0.10.0
libtpu: 0.0.40
codegen_flags: <defaults>
</compile_context>

<pallas_src>
import functools

import jax
import jax.numpy as jnp
from jax.experimental import pallas as pl
from jax.experimental.pallas import tpu as pltpu

_LANE = 128
_BLOCK_BUDGET_BYTES = 4 * 1024 * 1024     # per-input DMA block
_VMEM_LIMIT_BYTES = 48 * 1024 * 1024      # explicit scoped-VMEM limit
_ACC_MAX_LANES = 65536                    # caps each (8, tf) f32 accumulator at 2 MiB
# TODO(synk): per-chip tuning of _BLOCK_BUDGET_BYTES (2-3 MiB v5e, 6-8 MiB v6e)
# via pltpu.get_tpu_info(); 4 MiB is a safe middle ground for all generations.


def _loss_kernel(x_ref, y_ref, out_ref, acc_max, acc_min, *,
                 rows, feat, slide, tr, tf, acc_rows, mask_rows, mask_cols):
    i = pl.program_id(0)          # row-tile index    ("parallel")
    j = pl.program_id(1)          # feature-tile index ("arbitrary", innermost)

    @pl.when(j == 0)
    def _():
        acc_max[...] = jnp.zeros_like(acc_max)
        acc_min[...] = jnp.zeros_like(acc_min)

    d = x_ref[...].astype(jnp.float32) - y_ref[...].astype(jnp.float32)
    d2 = d * d

    # Tail masking only when the grid is ragged (static elision).
    if mask_rows or mask_cols:
        valid = None
        if mask_rows:
            r = i * tr + jax.lax.broadcasted_iota(jnp.int32, (tr, 1), 0)
            valid = r < rows
        if mask_cols:
            c = j * tf + jax.lax.broadcasted_iota(jnp.int32, (1, tf), 1)
            cmask = c < feat
            valid = cmask if valid is None else (valid & cmask)
        d2 = jnp.where(valid, d2, 0.0)

    def partial_sum(v):           # (tr, tf) -> (acc_rows, tf); VPU adds only
        if acc_rows == 8:
            return v.reshape(tr // 8, 8, tf).sum(axis=0)
        return jnp.sum(v, axis=0, keepdims=True)

    row_start = i * tr
    full_max = row_start + tr <= slide     # tile entirely in the "max" half
    full_min = row_start >= slide          # tile entirely in the "min" half

    @pl.when(full_max)
    def _():
        acc_max[...] += partial_sum(d2)

    @pl.when(full_min)
    def _():
        acc_min[...] += partial_sum(d2)

    @pl.when(jnp.logical_not(full_max | full_min))   # the one straddling tile
    def _():
        r = row_start + jax.lax.broadcasted_iota(jnp.int32, (tr, 1), 0)
        d2_max = jnp.where(r < slide, d2, 0.0)
        acc_max[...] += partial_sum(d2_max)
        acc_min[...] += partial_sum(d2 - d2_max)      # exact complement

    @pl.when(j == pl.num_programs(1) - 1)
    def _():
        sum_max = jnp.sum(acc_max[...])
        sum_min = jnp.sum(acc_min[...])
        sub = jax.lax.broadcasted_iota(jnp.int32, (1, 8, _LANE), 1)
        out_ref[...] = jnp.where(sub == 0, sum_max,
                                 jnp.where(sub == 1, sum_min, 0.0))


def my_loss(x, y):
    """Pallas implementation of My_loss.forward(x, y)."""
    n = x.shape[0]
    slide = n // 2
    # NOTE: n < 2 degenerates (mean over an empty half) exactly like the
    # PyTorch reference (NaN); not guarded here.

    x2 = x.reshape(n, -1)         # keep original dtype; cast-on-load in kernel
    y2 = y.reshape(n, -1)
    rows, feat = x2.shape
    itemsize = jnp.dtype(x2.dtype).itemsize

    # ---- feature tile: as wide as the budget allows (long contiguous runs) ----
    tf_budget = max(_LANE, (_BLOCK_BUDGET_BYTES // (8 * itemsize)) // _LANE * _LANE)
    tf_budget = min(tf_budget, _ACC_MAX_LANES)
    min_tf = max(_LANE, (-(-512 // itemsize) + _LANE - 1) // _LANE * _LANE)  # >=512B runs
    tf = feat if feat <= max(tf_budget, min_tf) else max(min_tf, tf_budget)

    # ---- row tile: fill the budget at width tf (full rows or multiple of 8) ----
    rows_fit = max(8, (_BLOCK_BUDGET_BYTES // max(1, tf * itemsize)) // 8 * 8)
    tr = rows if rows <= rows_fit else rows_fit

    grid_rows = pl.cdiv(rows, tr)
    grid_feat = pl.cdiv(feat, tf)
    acc_rows = 8 if tr % 8 == 0 else 1
    mask_rows = (rows % tr) != 0
    mask_cols = (feat % tf) != 0

    kernel = functools.partial(
        _loss_kernel, rows=rows, feat=feat, slide=slide, tr=tr, tf=tf,
        acc_rows=acc_rows, mask_rows=mask_rows, mask_cols=mask_cols)

    total = rows * feat
    cost = pl.CostEstimate(
        flops=3 * total, transcendentals=0,
        bytes_accessed=2 * total * itemsize + grid_rows * 8 * _LANE * 4)

    partials = pl.pallas_call(
        kernel,
        out_shape=jax.ShapeDtypeStruct((grid_rows, 8, _LANE), jnp.float32),
        grid_spec=pltpu.PrefetchScalarGridSpec(
            num_scalar_prefetch=0,
            grid=(grid_rows, grid_feat),
            in_specs=[
                pl.BlockSpec((tr, tf), lambda i, j: (i, j)),
                pl.BlockSpec((tr, tf), lambda i, j: (i, j)),
            ],
            out_specs=pl.BlockSpec((1, 8, _LANE), lambda i, j: (i, 0, 0)),
            scratch_shapes=[
                pltpu.VMEM((acc_rows, tf), jnp.float32),   # "max"-half partials
                pltpu.VMEM((acc_rows, tf), jnp.float32),   # "min"-half partials
            ],
        ),
        compiler_params=pltpu.CompilerParams(
            dimension_semantics=("parallel", "arbitrary"),
            vmem_limit_bytes=_VMEM_LIMIT_BYTES),
        cost_estimate=cost,
    )(x2, y2)

    # Tiny O(grid_rows) epilogue: combine per-row-tile partials, mean, clamp.
    n_max = float(slide * feat)
    n_min = float((rows - slide) * feat)
    avg_max = jnp.sum(partials[:, 0, 0]) / n_max
    avg_min = jnp.sum(partials[:, 1, 0]) / n_min
    avg_min = jnp.maximum(avg_min, 0.0)              # `if avg_min < 0` parity
    avg_min = jnp.minimum(avg_min, 5.0 * avg_max)    # `if avg_min > 5*avg_max` parity
    return avg_max - 0.1 * avg_min


def _my_loss_ref(x, y):
    """Pure-JAX reference matching the PyTorch forward."""
    n = x.shape[0]
    slide = n // 2
    avg_max = jnp.mean((x[:slide] - y[:slide]) ** 2)
    avg_min = jnp.mean((x[slide:] - y[slide:]) ** 2)
    avg_min = jnp.maximum(avg_min, 0.0)
    avg_min = jnp.minimum(avg_min, 5.0 * avg_max)
    return avg_max - 0.1 * avg_min


if __name__ == "__main__":
    key = jax.random.PRNGKey(0)
    kx, ky = jax.random.split(key)
    # Small NCHW-style inputs (batch=2 -> halves of 1 row each).
    x = jax.random.normal(kx, (2, 4, 16, 16), dtype=jnp.float32)
    y = jax.random.normal(ky, (2, 4, 16, 16), dtype=jnp.float32)

    loss = jax.block_until_ready(my_loss(x, y))
    ref = jax.block_until_ready(_my_loss_ref(x, y))

    assert jnp.allclose(loss, ref, rtol=1e-5, atol=1e-5), (loss, ref)
    print("KERNEL_OK")
</pallas_src>

<mosaic_0001>
module attributes {stable_mosaic.version = 11 : i64} {
  func.func @_loss_kernel(%arg0: i32, %arg1: i32, %arg2: memref<2x1024xf32, #tpu.memory_space<vmem>>, %arg3: memref<2x1024xf32, #tpu.memory_space<vmem>>, %arg4: memref<1x8x128xf32, #tpu.memory_space<vmem>>, %arg5: memref<1x1024xf32, #tpu.memory_space<vmem>>, %arg6: memref<1x1024xf32, #tpu.memory_space<vmem>>) attributes {dimension_semantics = [#tpu.dimension_semantics<parallel>, #tpu.dimension_semantics<arbitrary>], iteration_bounds = array<i64: 1, 1>, scalar_prefetch = 0 : i64, scratch_operands = 2 : i64, tpu.core_type = #tpu.core_type<tc>, window_params = [{transform_indices = @transform_0, window_bounds = array<i64: 2, 1024>}, {transform_indices = @transform_1, window_bounds = array<i64: 2, 1024>}, {transform_indices = @transform_2, window_bounds = array<i64: 1, 8, 128>}]} {
    %c0_i32 = arith.constant 0 : i32
    %0 = arith.cmpi eq, %arg1, %c0_i32 : i32
    %1 = arith.extui %0 : i1 to i32
    %c0_i32_0 = arith.constant 0 : i32
    %2 = arith.cmpi ne, %1, %c0_i32_0 : i32
    scf.if %2 {
      %cst = arith.constant 0.000000e+00 : f32
      %22 = vector.broadcast %cst : f32 to vector<1x1024xf32>
      %c0_11 = arith.constant 0 : index
      %c0_12 = arith.constant 0 : index
      %23 = vector.load %arg5[%c0_11, %c0_12] : memref<1x1024xf32, #tpu.memory_space<vmem>>, vector<1x1024xf32>
      tpu.vector_store %arg5[%c0_11, %c0_12], %22 {strides = array<i32>} : memref<1x1024xf32, #tpu.memory_space<vmem>>, vector<1x1024xf32>,
      %cst_13 = arith.constant 0.000000e+00 : f32
      %24 = vector.broadcast %cst_13 : f32 to vector<1x1024xf32>
      %c0_14 = arith.constant 0 : index
      %c0_15 = arith.constant 0 : index
      %25 = vector.load %arg6[%c0_14, %c0_15] : memref<1x1024xf32, #tpu.memory_space<vmem>>, vector<1x1024xf32>
      tpu.vector_store %arg6[%c0_14, %c0_15], %24 {strides = array<i32>} : memref<1x1024xf32, #tpu.memory_space<vmem>>, vector<1x1024xf32>,
    } else {
    }
    %c0 = arith.constant 0 : index
    %c0_1 = arith.constant 0 : index
    %3 = vector.load %arg2[%c0, %c0_1] : memref<2x1024xf32, #tpu.memory_space<vmem>>, vector<2x1024xf32>
    %c0_2 = arith.constant 0 : index
    %c0_3 = arith.constant 0 : index
    %4 = vector.load %arg3[%c0_2, %c0_3] : memref<2x1024xf32, #tpu.memory_space<vmem>>, vector<2x1024xf32>
    %5 = arith.subf %3, %4 : vector<2x1024xf32>
    %6 = arith.mulf %5, %5 : vector<2x1024xf32>
    %c2_i32 = arith.constant 2 : i32
    %7 = arith.muli %arg0, %c2_i32 : i32
    %c2_i32_4 = arith.constant 2 : i32
    %8 = arith.addi %7, %c2_i32_4 : i32
    %c1_i32 = arith.constant 1 : i32
    %9 = arith.cmpi sle, %8, %c1_i32 : i32
    %c1_i32_5 = arith.constant 1 : i32
    %10 = arith.cmpi sge, %7, %c1_i32_5 : i32
    %11 = arith.extui %9 : i1 to i32
    %c0_i32_6 = arith.constant 0 : i32
    %12 = arith.cmpi ne, %11, %c0_i32_6 : i32
    scf.if %12 {
      %c0_11 = arith.constant 0 : index
      %c0_12 = arith.constant 0 : index
      %22 = vector.load %arg5[%c0_11, %c0_12] : memref<1x1024xf32, #tpu.memory_space<vmem>>, vector<1x1024xf32>
      %cst = arith.constant dense<0.000000e+00> : vector<1024xf32>
      %23 = vector.multi_reduction <add>, %6, %cst [0] : vector<2x1024xf32> to vector<1024xf32>
      %24 = vector.shape_cast %23 : vector<1024xf32> to vector<1x1024xf32>
      %25 = arith.addf %22, %24 : vector<1x1024xf32>
      %c0_13 = arith.constant 0 : index
      %c0_14 = arith.constant 0 : index
      %26 = vector.load %arg5[%c0_13, %c0_14] : memref<1x1024xf32, #tpu.memory_space<vmem>>, vector<1x1024xf32>
      tpu.vector_store %arg5[%c0_13, %c0_14], %25 {strides = array<i32>} : memref<1x1024xf32, #tpu.memory_space<vmem>>, vector<1x1024xf32>,
    } else {
    }
    %13 = arith.extui %10 : i1 to i32
    %c0_i32_7 = arith.constant 0 : i32
    %14 = arith.cmpi ne, %13, %c0_i32_7 : i32
    scf.if %14 {
      %c0_11 = arith.constant 0 : index
      %c0_12 = arith.constant 0 : index
      %22 = vector.load %arg6[%c0_11, %c0_12] : memref<1x1024xf32, #tpu.memory_space<vmem>>, vector<1x1024xf32>
      %cst = arith.constant dense<0.000000e+00> : vector<1024xf32>
      %23 = vector.multi_reduction <add>, %6, %cst [0] : vector<2x1024xf32> to vector<1024xf32>
      %24 = vector.shape_cast %23 : vector<1024xf32> to vector<1x1024xf32>
      %25 = arith.addf %22, %24 : vector<1x1024xf32>
      %c0_13 = arith.constant 0 : index
      %c0_14 = arith.constant 0 : index
      %26 = vector.load %arg6[%c0_13, %c0_14] : memref<1x1024xf32, #tpu.memory_space<vmem>>, vector<1x1024xf32>
      tpu.vector_store %arg6[%c0_13, %c0_14], %25 {strides = array<i32>} : memref<1x1024xf32, #tpu.memory_space<vmem>>, vector<1x1024xf32>,
    } else {
    }
    %15 = arith.ori %9, %10 : i1
    %true = arith.constant true
    %16 = arith.xori %15, %true : i1
    %17 = arith.extui %16 : i1 to i32
    %c0_i32_8 = arith.constant 0 : i32
    %18 = arith.cmpi ne, %17, %c0_i32_8 : i32
    scf.if %18 {
      %22 = tpu.iota {dimensions = array<i32: 0>} : vector<2x1xi32>
      %23 = vector.broadcast %7 : i32 to vector<2x1xi32>
      %24 = arith.addi %23, %22 : vector<2x1xi32>
      %c1_i32_11 = arith.constant 1 : i32
      %25 = vector.broadcast %c1_i32_11 : i32 to vector<2x1xi32>
      %26 = arith.cmpi slt, %24, %25 : vector<2x1xi32>
      %cst = arith.constant 0.000000e+00 : f32
      %27 = vector.shape_cast %26 : vector<2x1xi1> to vector<2x1xi1>
      %28 = vector.broadcast %27 : vector<2x1xi1> to vector<2x1024xi1>
      %29 = vector.broadcast %cst : f32 to vector<2x1024xf32>
      %30 = arith.select %28, %6, %29 : vector<2x1024xi1>, vector<2x1024xf32>
      %c0_12 = arith.constant 0 : index
      %c0_13 = arith.constant 0 : index
      %31 = vector.load %arg5[%c0_12, %c0_13] : memref<1x1024xf32, #tpu.memory_space<vmem>>, vector<1x1024xf32>
      %cst_14 = arith.constant dense<0.000000e+00> : vector<1024xf32>
      %32 = vector.multi_reduction <add>, %30, %cst_14 [0] : vector<2x1024xf32> to vector<1024xf32>
      %33 = vector.shape_cast %32 : vector<1024xf32> to vector<1x1024xf32>
      %34 = arith.addf %31, %33 : vector<1x1024xf32>
      %c0_15 = arith.constant 0 : index
      %c0_16 = arith.constant 0 : index
      %35 = vector.load %arg5[%c0_15, %c0_16] : memref<1x1024xf32, #tpu.memory_space<vmem>>, vector<1x1024xf32>
      tpu.vector_store %arg5[%c0_15, %c0_16], %34 {strides = array<i32>} : memref<1x1024xf32, #tpu.memory_space<vmem>>, vector<1x1024xf32>,
      %c0_17 = arith.constant 0 : index
      %c0_18 = arith.constant 0 : index
      %36 = vector.load %arg6[%c0_17, %c0_18] : memref<1x1024xf32, #tpu.memory_space<vmem>>, vector<1x1024xf32>
      %37 = arith.subf %6, %30 : vector<2x1024xf32>
      %cst_19 = arith.constant dense<0.000000e+00> : vector<1024xf32>
      %38 = vector.multi_reduction <add>, %37, %cst_19 [0] : vector<2x1024xf32> to vector<1024xf32>
      %39 = vector.shape_cast %38 : vector<1024xf32> to vector<1x1024xf32>
      %40 = arith.addf %36, %39 : vector<1x1024xf32>
      %c0_20 = arith.constant 0 : index
      %c0_21 = arith.constant 0 : index
      %41 = vector.load %arg6[%c0_20, %c0_21] : memref<1x1024xf32, #tpu.memory_space<vmem>>, vector<1x1024xf32>
      tpu.vector_store %arg6[%c0_20, %c0_21], %40 {strides = array<i32>} : memref<1x1024xf32, #tpu.memory_space<vmem>>, vector<1x1024xf32>,
    } else {
    }
    %c0_i32_9 = arith.constant 0 : i32
    %19 = arith.cmpi eq, %arg1, %c0_i32_9 : i32
    %20 = arith.extui %19 : i1 to i32
    %c0_i32_10 = arith.constant 0 : i32
    %21 = arith.cmpi ne, %20, %c0_i32_10 : i32
    scf.if %21 {
      %c0_11 = arith.constant 0 : index
      %c0_12 = arith.constant 0 : index
      %22 = vector.load %arg5[%c0_11, %c0_12] : memref<1x1024xf32, #tpu.memory_space<vmem>>, vector<1x1024xf32>
      %23 = vector.shape_cast %22 : vector<1x1024xf32> to vector<1x1x1024xf32>
      %cst = arith.constant dense<0.000000e+00> : vector<1xf32>
      %24 = vector.multi_reduction <add>, %23, %cst [1, 2] : vector<1x1x1024xf32> to vector<1xf32>
      %25 = vector.shape_cast %24 : vector<1xf32> to vector<1x1x1xf32>
      %26 = vector.extract %25[0, 0, 0] : f32 from vector<1x1x1xf32>
      %c0_13 = arith.constant 0 : index
      %c0_14 = arith.constant 0 : index
      %27 = vector.load %arg6[%c0_13, %c0_14] : memref<1x1024xf32, #tpu.memory_space<vmem>>, vector<1x1024xf32>
      %28 = vector.shape_cast %27 : vector<1x1024xf32> to vector<1x1x1024xf32>
      %cst_15 = arith.constant dense<0.000000e+00> : vector<1xf32>
      %29 = vector.multi_reduction <add>, %28, %cst_15 [1, 2] : vector<1x1x1024xf32> to vector<1xf32>
      %30 = vector.shape_cast %29 : vector<1xf32> to vector<1x1x1xf32>
      %31 = vector.extract %30[0, 0, 0] : f32 from vector<1x1x1xf32>
      %32 = tpu.iota {dimensions = array<i32: 1>} : vector<1x8x128xi32>
      %c0_i32_16 = arith.constant 0 : i32
      %33 = vector.broadcast %c0_i32_16 : i32 to vector<1x8x128xi32>
      %34 = arith.cmpi eq, %32, %33 : vector<1x8x128xi32>
      %c1_i32_17 = arith.constant 1 : i32
      %35 = vector.broadcast %c1_i32_17 : i32 to vector<1x8x128xi32>
      %36 = arith.cmpi eq, %32, %35 : vector<1x8x128xi32>
      %cst_18 = arith.constant 0.000000e+00 : f32
      %37 = vector.broadcast %31 : f32 to vector<1x8x128xf32>
      %38 = vector.broadcast %cst_18 : f32 to vector<1x8x128xf32>
      %39 = arith.select %36, %37, %38 : vector<1x8x128xi1>, vector<1x8x128xf32>
      %40 = vector.broadcast %26 : f32 to vector<1x8x128xf32>
      %41 = arith.select %34, %40, %39 : vector<1x8x128xi1>, vector<1x8x128xf32>
      %c0_19 = arith.constant 0 : index
      %c0_20 = arith.constant 0 : index
      %c0_21 = arith.constant 0 : index
      %42 = vector.load %arg4[%c0_19, %c0_20, %c0_21] : memref<1x8x128xf32, #tpu.memory_space<vmem>>, vector<1x8x128xf32>
      tpu.vector_store %arg4[%c0_19, %c0_20, %c0_21], %41 {strides = array<i32>} : memref<1x8x128xf32, #tpu.memory_space<vmem>>, vector<1x8x128xf32>,
    } else {
    }
    return
  }
  func.func @transform_0(%arg0: i32, %arg1: i32) -> (i32, i32) {
    %c0_i32 = arith.constant 0 : i32
    return %arg0, %arg1 : i32, i32
  }
  func.func @transform_1(%arg0: i32, %arg1: i32) -> (i32, i32) {
    %c0_i32 = arith.constant 0 : i32
    return %arg0, %arg1 : i32, i32
  }
  func.func @transform_2(%arg0: i32, %arg1: i32) -> (i32, i32, i32) {
    %c0_i32 = arith.constant 0 : i32
    %c0_i32_0 = arith.constant 0 : i32
    %c0_i32_1 = arith.constant 0 : i32
    return %arg0, %c0_i32, %c0_i32_0 : i32, i32, i32
  }
}

</mosaic_0001>

<llo_original>
// kernel: tpu_custom_call.1
$region0: #{tpu_custom_call.1}
  #allocation0 [shape = 'u32[]', space=smem, size = 0x4, offset = 0x4, fixed_abs, tag = 'smem constant byte address 0x4 - core index']
  #allocation1 [shape = 'u32[144,128]{1,0:T(1,128)}', space=vmem, size = 0x12000, scoped, tag = 'internal scratch']
  #allocation2 [shape = 'f32[1,1024]{1,0:T(1,128)}', space=vmem, size = 0x1000, scoped, tag = 'scratch operand']
  #allocation3 [shape = 'f32[1,1024]{1,0:T(1,128)}', space=vmem, size = 0x1000, scoped, tag = 'scratch operand']
  %s0 = inlined_call_operand.hbm [shape: f32[2,1024], index: 0, kind: input, shape index: {}]
  %s1 = inlined_call_operand.hbm [shape: f32[2,1024], index: 1, kind: input, shape index: {}]
  %s2 = inlined_call_operand.hbm [shape: f32[1,8,128], index: 2, kind: output, shape index: {}]
  %s3 = sld [smem:[#allocation0]]
  $region46: #{tpu_custom_call.1} parent=0
    _
  %s5 = ssub.s32 1, %s3
  %s6 = scalar_select 0, %s5, %s3
  $region1: #{tpu_custom_call.1} parent=0
    #allocation4 [shape = 'u8[8192]{0}', space=vmem, size = 0x2000, scoped, tag = 'input window, operand 0, single buffered']
    #allocation5 [shape = 's32[1]{0}', space=sflag, size = 0x4, scoped, tag = 'scoped memory for tpu_custom_call.1']
    #allocation6 [shape = 's32[1]{0}', space=sflag, size = 0x4, scoped, tag = 'scoped memory for tpu_custom_call.1']
    #allocation7 [shape = 'u8[8192]{0}', space=vmem, size = 0x2000, scoped, tag = 'input window, operand 1, single buffered']
    #allocation8 [shape = 's32[1]{0}', space=sflag, size = 0x4, scoped, tag = 'scoped memory for tpu_custom_call.1']
    #allocation9 [shape = 'u8[4096]{0}', space=vmem, size = 0x1000, scoped, tag = 'output window, operand 0, single buffered']
    %7 = vsyncpa [#allocation5], 0
    %8 = vsyncpa [#allocation8], 0
    %9 = vsyncpa [#allocation6], 0
    // Predicated region
    $region2: #{tpu_custom_call.1} parent=1 // pred_check
      _
    $region3: #{tpu_custom_call.1} parent=1 // pred_check_branch
      %11 = sbr.rel (0) target = $region5
    $region4: #{tpu_custom_call.1} parent=1 // pred_region
      %s13 = ssub.s32 256, 256
      %14 = vsyncadd [#allocation5], %s13
      %s16 = sshll.u32 [#allocation4], 4
      %s17 = int_to_ptr.vmem [resolvable:$true] %s16
      %19 = dma.hbm_to_vmem [thread:$0]  %s0, 256, %s17, [#allocation5]
    $region5: #{tpu_custom_call.1} parent=1 // pred_fallthru
      _
    // Predicated region
    $region6: #{tpu_custom_call.1} parent=1 // pred_check
      _
    $region7: #{tpu_custom_call.1} parent=1 // pred_check_branch
      %21 = sbr.rel (0) target = $region9
    $region8: #{tpu_custom_call.1} parent=1 // pred_region
      %s23 = ssub.s32 256, 256
      %24 = vsyncadd [#allocation8], %s23
      %s26 = sshll.u32 [#allocation7], 4
      %s27 = int_to_ptr.vmem [resolvable:$true] %s26
      %29 = dma.hbm_to_vmem [thread:$0]  %s1, 256, %s27, [#allocation8]
    $region9: #{tpu_custom_call.1} parent=1 // pred_fallthru
      _
    // Predicated region
    $region10: #{tpu_custom_call.1} parent=1 // pred_check
      _
    $region11: #{tpu_custom_call.1} parent=1 // pred_check_branch
      %31 = sbr.rel (0) target = $region13
    $region12: #{tpu_custom_call.1} parent=1 // pred_region
      %32 = dma.done [#allocation5], 256
    $region13: #{tpu_custom_call.1} parent=1 // pred_fallthru
      _
    // Predicated region
    $region14: #{tpu_custom_call.1} parent=1 // pred_check
      _
    $region15: #{tpu_custom_call.1} parent=1 // pred_check_branch
      %34 = sbr.rel (0) target = $region17
    $region16: #{tpu_custom_call.1} parent=1 // pred_region
      %35 = dma.done [#allocation8], 256
    $region17: #{tpu_custom_call.1} parent=1 // pred_fallthru
      _
    %p36 = scmp.eq.s32.totalorder 0, 0
    // Predicated region
    $region18: #{tpu_custom_call.1} parent=1 // pred_check
      %p37 = pneg %p36
    $region19: #{tpu_custom_call.1} parent=1 // pred_check_branch
      %39 = sbr.rel (%p37) target = $region21
    $region20: #{tpu_custom_call.1} parent=1 // pred_region
      %40 = vst [vmem:[#allocation2] sm:$0xff] 0.0
      %41 = vst [vmem:[#allocation3] sm:$0xff] 0.0
    $region21: #{tpu_custom_call.1} parent=1 // pred_fallthru
      _
    %v42 = vld [vmem:[#allocation4] sm:$0xff]
    %v43 = vld [vmem:[#allocation4 + $0x8] sm:$0xff]
    %v44 = vld [vmem:[#allocation7] sm:$0xff]
    %v45 = vld [vmem:[#allocation7 + $0x8] sm:$0xff]
    %v46 = vsub.f32 %v42, %v44
    %v47 = vsub.f32 %v43, %v45
    %v48 = vmul.f32 %v46, %v46
    %v49 = vmul.f32 %v47, %v47
    %s50 = smul.u32 0, 2
    %s51 = sadd.s32 %s50, 2
    %p52 = scmp.le.s32.totalorder %s51, 1
    %p53 = scmp.ge.s32.totalorder %s50, 1
    // Predicated region
    $region22: #{tpu_custom_call.1} parent=1 // pred_check
      %p54 = pneg %p52
    $region23: #{tpu_custom_call.1} parent=1 // pred_check_branch
      %56 = sbr.rel (%p54) target = $region25
    $region24: #{tpu_custom_call.1} parent=1 // pred_region
      %v57 = vld [vmem:[#allocation2] sm:$0xff]
      %v60 = vcombine.high %v48, %v48
      %v62 = vunpack.c.l.s4 1983009808
      %v63 = vunpack.c.0.s8 %v62
      %v64 = vlaneseq
      %v65 = vshrl.u32 %v64, 7
      %v66 = vsub.s32 %v63, %v65
      %v67 = vrot.slane %v48, %v66
      %v69 = vunpack.c.l.s4 1983009808
      %v70 = vunpack.c.0.s8 %v69
      %v71 = vlaneseq
      %v72 = vshrl.u32 %v71, 7
      %v73 = vsub.s32 %v70, %v72
      %v74 = vrot.slane %v60, %v73
      %v75 = vcombine.high %v67, %v67
      %v76 = vcombine.high %v74, %v74
      %v77 = vcombine.high %v49, %v49
      %v79 = vunpack.c.l.s4 1983009808
      %v80 = vunpack.c.0.s8 %v79
      %v81 = vlaneseq
      %v82 = vshrl.u32 %v81, 7
      %v83 = vsub.s32 %v80, %v82
      %v84 = vrot.slane %v49, %v83
      %v86 = vunpack.c.l.s4 1983009808
      %v87 = vunpack.c.0.s8 %v86
      %v88 = vlaneseq
      %v89 = vshrl.u32 %v88, 7
      %v90 = vsub.s32 %v87, %v89
      %v91 = vrot.slane %v77, %v90
      %v92 = vcombine.high %v84, %v84
      %v93 = vcombine.high %v91, %v91
      %vm102 = vcmask 1041408
      %v103 = vsel %vm102, %v67, 0.0
      %v104 = vrot.slane %v103, 4
      %v105 = vadd.f32 %v103, %v104
      %v106 = vrot.slane %v105, 2
      %v107 = vadd.f32 %v105, %v106
      %v108 = vrot.slane %v107, 1
      %v109 = vadd.f32 %v107, %v108
      %v110 = vsel %vm102, %v75, 0.0
      %v111 = vrot.slane %v110, 4
      %v112 = vadd.f32 %v110, %v111
      %v113 = vrot.slane %v112, 2
      %v114 = vadd.f32 %v112, %v113
      %v115 = vrot.slane %v114, 1
      %v116 = vadd.f32 %v114, %v115
      %v117 = vsel %vm102, %v74, 0.0
      %v118 = vrot.slane %v117, 4
      %v119 = vadd.f32 %v117, %v118
      %v120 = vrot.slane %v119, 2
      %v121 = vadd.f32 %v119, %v120
      %v122 = vrot.slane %v121, 1
      %v123 = vadd.f32 %v121, %v122
      %v124 = vsel %vm102, %v76, 0.0
      %v125 = vrot.slane %v124, 4
      %v126 = vadd.f32 %v124, %v125
      %v127 = vrot.slane %v126, 2
      %v128 = vadd.f32 %v126, %v127
      %v129 = vrot.slane %v128, 1
      %v130 = vadd.f32 %v128, %v129
      %v131 = vsel %vm102, %v84, 0.0
      %v132 = vrot.slane %v131, 4
      %v133 = vadd.f32 %v131, %v132
      %v134 = vrot.slane %v133, 2
      %v135 = vadd.f32 %v133, %v134
      %v136 = vrot.slane %v135, 1
      %v137 = vadd.f32 %v135, %v136
      %v138 = vsel %vm102, %v92, 0.0
      %v139 = vrot.slane %v138, 4
      %v140 = vadd.f32 %v138, %v139
      %v141 = vrot.slane %v140, 2
      %v142 = vadd.f32 %v140, %v141
      %v143 = vrot.slane %v142, 1
      %v144 = vadd.f32 %v142, %v143
      %v145 = vsel %vm102, %v91, 0.0
      %v146 = vrot.slane %v145, 4
      %v147 = vadd.f32 %v145, %v146
      %v148 = vrot.slane %v147, 2
      %v149 = vadd.f32 %v147, %v148
      %v150 = vrot.slane %v149, 1
      %v151 = vadd.f32 %v149, %v150
      %v152 = vsel %vm102, %v93, 0.0
      %v153 = vrot.slane %v152, 4
      %v154 = vadd.f32 %v152, %v153
      %v155 = vrot.slane %v154, 2
      %v156 = vadd.f32 %v154, %v155
      %v157 = vrot.slane %v156, 1
      %v158 = vadd.f32 %v156, %v157
      %v167 = vcombine.low %v109, %v116
      %v168 = vcombine.low %v123, %v130
      %v169 = vcombine.low %v137, %v144
      %v170 = vcombine.low %v151, %v158
      %v172 = vunpack.c.l.s4 1966171168
      %v173 = vunpack.c.0.s8 %v172
      %v174 = vlaneseq
      %v175 = vshrl.u32 %v174, 7
      %v176 = vsub.s32 %v173, %v175
      %v177 = vrot.slane %v167, %v176
      %v179 = vunpack.c.l.s4 1966171168
      %v180 = vunpack.c.0.s8 %v179
      %v181 = vlaneseq
      %v182 = vshrl.u32 %v181, 7
      %v183 = vsub.s32 %v180, %v182
      %v184 = vrot.slane %v168, %v183
      %v186 = vunpack.c.l.s4 1966171168
      %v187 = vunpack.c.0.s8 %v186
      %v188 = vlaneseq
      %v189 = vshrl.u32 %v188, 7
      %v190 = vsub.s32 %v187, %v189
      %v191 = vrot.slane %v169, %v190
      %v193 = vunpack.c.l.s4 1966171168
      %v194 = vunpack.c.0.s8 %v193
      %v195 = vlaneseq
      %v196 = vshrl.u32 %v195, 7
      %v197 = vsub.s32 %v194, %v196
      %v198 = vrot.slane %v170, %v197
      %v199 = vcombine.low %v177, %v184
      %v200 = vcombine.low %v191, %v198
      %v202 = vunpack.c.l.s4 1966171168
      %v203 = vunpack.c.0.s8 %v202
      %v204 = vlaneseq
      %v205 = vshrl.u32 %v204, 7
      %v206 = vsub.s32 %v203, %v205
      %v207 = vrot.slane %v199, %v206
      %v209 = vunpack.c.l.s4 1966171168
      %v210 = vunpack.c.0.s8 %v209
      %v211 = vlaneseq
      %v212 = vshrl.u32 %v211, 7
      %v213 = vsub.s32 %v210, %v212
      %v214 = vrot.slane %v200, %v213
      %v215 = vcombine.low %v207, %v214
      %v217 = vadd.f32 %v57, %v215
      %218 = vst [vmem:[#allocation2] sm:$0xff] %v217
    $region25: #{tpu_custom_call.1} parent=1 // pred_fallthru
      _
    // Predicated region
    $region26: #{tpu_custom_call.1} parent=1 // pred_check
      %p219 = pneg %p53
    $region27: #{tpu_custom_call.1} parent=1 // pred_check_branch
      %221 = sbr.rel (%p219) target = $region29
    $region28: #{tpu_custom_call.1} parent=1 // pred_region
      %v222 = vld [vmem:[#allocation3] sm:$0xff]
      %v225 = vcombine.high %v48, %v48
      %v227 = vunpack.c.l.s4 1983009808
      %v228 = vunpack.c.0.s8 %v227
      %v229 = vlaneseq
      %v230 = vshrl.u32 %v229, 7
      %v231 = vsub.s32 %v228, %v230
      %v232 = vrot.slane %v48, %v231
      %v234 = vunpack.c.l.s4 1983009808
      %v235 = vunpack.c.0.s8 %v234
      %v236 = vlaneseq
      %v237 = vshrl.u32 %v236, 7
      %v238 = vsub.s32 %v235, %v237
      %v239 = vrot.slane %v225, %v238
      %v240 = vcombine.high %v232, %v232
      %v241 = vcombine.high %v239, %v239
      %v242 = vcombine.high %v49, %v49
      %v244 = vunpack.c.l.s4 1983009808
      %v245 = vunpack.c.0.s8 %v244
      %v246 = vlaneseq
      %v247 = vshrl.u32 %v246, 7
      %v248 = vsub.s32 %v245, %v247
      %v249 = vrot.slane %v49, %v248
      %v251 = vunpack.c.l.s4 1983009808
      %v252 = vunpack.c.0.s8 %v251
      %v253 = vlaneseq
      %v254 = vshrl.u32 %v253, 7
      %v255 = vsub.s32 %v252, %v254
      %v256 = vrot.slane %v242, %v255
      %v257 = vcombine.high %v249, %v249
      %v258 = vcombine.high %v256, %v256
      %vm267 = vcmask 1041408
      %v268 = vsel %vm267, %v232, 0.0
      %v269 = vrot.slane %v268, 4
      %v270 = vadd.f32 %v268, %v269
      %v271 = vrot.slane %v270, 2
      %v272 = vadd.f32 %v270, %v271
      %v273 = vrot.slane %v272, 1
      %v274 = vadd.f32 %v272, %v273
      %v275 = vsel %vm267, %v240, 0.0
      %v276 = vrot.slane %v275, 4
      %v277 = vadd.f32 %v275, %v276
      %v278 = vrot.slane %v277, 2
      %v279 = vadd.f32 %v277, %v278
      %v280 = vrot.slane %v279, 1
      %v281 = vadd.f32 %v279, %v280
      %v282 = vsel %vm267, %v239, 0.0
      %v283 = vrot.slane %v282, 4
      %v284 = vadd.f32 %v282, %v283
      %v285 = vrot.slane %v284, 2
      %v286 = vadd.f32 %v284, %v285
      %v287 = vrot.slane %v286, 1
      %v288 = vadd.f32 %v286, %v287
      %v289 = vsel %vm267, %v241, 0.0
      %v290 = vrot.slane %v289, 4
      %v291 = vadd.f32 %v289, %v290
      %v292 = vrot.slane %v291, 2
      %v293 = vadd.f32 %v291, %v292
      %v294 = vrot.slane %v293, 1
      %v295 = vadd.f32 %v293, %v294
      %v296 = vsel %vm267, %v249, 0.0
      %v297 = vrot.slane %v296, 4
      %v298 = vadd.f32 %v296, %v297
      %v299 = vrot.slane %v298, 2
      %v300 = vadd.f32 %v298, %v299
      %v301 = vrot.slane %v300, 1
      %v302 = vadd.f32 %v300, %v301
      %v303 = vsel %vm267, %v257, 0.0
      %v304 = vrot.slane %v303, 4
      %v305 = vadd.f32 %v303, %v304
      %v306 = vrot.slane %v305, 2
      %v307 = vadd.f32 %v305, %v306
      %v308 = vrot.slane %v307, 1
      %v309 = vadd.f32 %v307, %v308
      %v310 = vsel %vm267, %v256, 0.0
      %v311 = vrot.slane %v310, 4
      %v312 = vadd.f32 %v310, %v311
      %v313 = vrot.slane %v312, 2
      %v314 = vadd.f32 %v312, %v313
      %v315 = vrot.slane %v314, 1
      %v316 = vadd.f32 %v314, %v315
      %v317 = vsel %vm267, %v258, 0.0
      %v318 = vrot.slane %v317, 4
      %v319 = vadd.f32 %v317, %v318
      %v320 = vrot.slane %v319, 2
      %v321 = vadd.f32 %v319, %v320
      %v322 = vrot.slane %v321, 1
      %v323 = vadd.f32 %v321, %v322
      %v332 = vcombine.low %v274, %v281
      %v333 = vcombine.low %v288, %v295
      %v334 = vcombine.low %v302, %v309
      %v335 = vcombine.low %v316, %v323
      %v337 = vunpack.c.l.s4 1966171168
      %v338 = vunpack.c.0.s8 %v337
      %v339 = vlaneseq
      %v340 = vshrl.u32 %v339, 7
      %v341 = vsub.s32 %v338, %v340
      %v342 = vrot.slane %v332, %v341
      %v344 = vunpack.c.l.s4 1966171168
      %v345 = vunpack.c.0.s8 %v344
      %v346 = vlaneseq
      %v347 = vshrl.u32 %v346, 7
      %v348 = vsub.s32 %v345, %v347
      %v349 = vrot.slane %v333, %v348
      %v351 = vunpack.c.l.s4 1966171168
      %v352 = vunpack.c.0.s8 %v351
      %v353 = vlaneseq
      %v354 = vshrl.u32 %v353, 7
      %v355 = vsub.s32 %v352, %v354
      %v356 = vrot.slane %v334, %v355
      %v358 = vunpack.c.l.s4 1966171168
      %v359 = vunpack.c.0.s8 %v358
      %v360 = vlaneseq
      %v361 = vshrl.u32 %v360, 7
      %v362 = vsub.s32 %v359, %v361
      %v363 = vrot.slane %v335, %v362
      %v364 = vcombine.low %v342, %v349
      %v365 = vcombine.low %v356, %v363
      %v367 = vunpack.c.l.s4 1966171168
      %v368 = vunpack.c.0.s8 %v367
      %v369 = vlaneseq
      %v370 = vshrl.u32 %v369, 7
      %v371 = vsub.s32 %v368, %v370
      %v372 = vrot.slane %v364, %v371
      %v374 = vunpack.c.l.s4 1966171168
      %v375 = vunpack.c.0.s8 %v374
      %v376 = vlaneseq
      %v377 = vshrl.u32 %v376, 7
      %v378 = vsub.s32 %v375, %v377
      %v379 = vrot.slane %v365, %v378
      %v380 = vcombine.low %v372, %v379
      %v382 = vadd.f32 %v222, %v380
      %383 = vst [vmem:[#allocation3] sm:$0xff] %v382
    $region29: #{tpu_custom_call.1} parent=1 // pred_fallthru
      _
    %p384 = por %p52, %p53
    %p385 = pneg %p384
    // Predicated region
    $region30: #{tpu_custom_call.1} parent=1 // pred_check
      _
    $region31: #{tpu_custom_call.1} parent=1 // pred_check_branch
      %387 = sbr.rel (%p384) target = $region33
    $region32: #{tpu_custom_call.1} parent=1 // pred_region
      %v388 = vlaneseq
      %v389 = vshrl.u32 %v388, 7
      %v390 = vstv %s50
      %v391 = vadd.s32 %v390, %v389
      %vm392 = vcmp.lt.s32.totalorder %v391, 1
      %v393 = vsel %vm392, 1, 0
      %vm394 = vcmp.eq.s32.totalorder %v393, 1
      %v397 = vcombine.high %v48, %v48
      %v399 = vunpack.c.l.s4 1983009808
      %v400 = vunpack.c.0.s8 %v399
      %v401 = vlaneseq
      %v402 = vshrl.u32 %v401, 7
      %v403 = vsub.s32 %v400, %v402
      %v404 = vrot.slane %v48, %v403
      %v406 = vunpack.c.l.s4 1983009808
      %v407 = vunpack.c.0.s8 %v406
      %v408 = vlaneseq
      %v409 = vshrl.u32 %v408, 7
      %v410 = vsub.s32 %v407, %v409
      %v411 = vrot.slane %v397, %v410
      %v412 = vcombine.high %v404, %v404
      %v413 = vcombine.high %v411, %v411
      %v414 = vcombine.high %v49, %v49
      %v416 = vunpack.c.l.s4 1983009808
      %v417 = vunpack.c.0.s8 %v416
      %v418 = vlaneseq
      %v419 = vshrl.u32 %v418, 7
      %v420 = vsub.s32 %v417, %v419
      %v421 = vrot.slane %v49, %v420
      %v423 = vunpack.c.l.s4 1983009808
      %v424 = vunpack.c.0.s8 %v423
      %v425 = vlaneseq
      %v426 = vshrl.u32 %v425, 7
      %v427 = vsub.s32 %v424, %v426
      %v428 = vrot.slane %v414, %v427
      %v429 = vcombine.high %v421, %v421
      %v430 = vcombine.high %v428, %v428
      %v439 = vsel %vm394, %v404, 0.0
      %v440 = vsel %vm394, %v412, 0.0
      %v441 = vsel %vm394, %v411, 0.0
      %v442 = vsel %vm394, %v413, 0.0
      %v443 = vsel %vm394, %v421, 0.0
      %v444 = vsel %vm394, %v429, 0.0
      %v445 = vsel %vm394, %v428, 0.0
      %v446 = vsel %vm394, %v430, 0.0
      %v447 = vld [vmem:[#allocation2] sm:$0xff]
      %vm448 = vcmask 1041408
      %v449 = vsel %vm448, %v439, 0.0
      %v450 = vrot.slane %v449, 4
      %v451 = vadd.f32 %v449, %v450
      %v452 = vrot.slane %v451, 2
      %v453 = vadd.f32 %v451, %v452
      %v454 = vrot.slane %v453, 1
      %v455 = vadd.f32 %v453, %v454
      %v456 = vsel %vm448, %v440, 0.0
      %v457 = vrot.slane %v456, 4
      %v458 = vadd.f32 %v456, %v457
      %v459 = vrot.slane %v458, 2
      %v460 = vadd.f32 %v458, %v459
      %v461 = vrot.slane %v460, 1
      %v462 = vadd.f32 %v460, %v461
      %v463 = vsel %vm448, %v441, 0.0
      %v464 = vrot.slane %v463, 4
      %v465 = vadd.f32 %v463, %v464
      %v466 = vrot.slane %v465, 2
      %v467 = vadd.f32 %v465, %v466
      %v468 = vrot.slane %v467, 1
      %v469 = vadd.f32 %v467, %v468
      %v470 = vsel %vm448, %v442, 0.0
      %v471 = vrot.slane %v470, 4
      %v472 = vadd.f32 %v470, %v471
      %v473 = vrot.slane %v472, 2
      %v474 = vadd.f32 %v472, %v473
      %v475 = vrot.slane %v474, 1
      %v476 = vadd.f32 %v474, %v475
      %v477 = vsel %vm448, %v443, 0.0
      %v478 = vrot.slane %v477, 4
      %v479 = vadd.f32 %v477, %v478
      %v480 = vrot.slane %v479, 2
      %v481 = vadd.f32 %v479, %v480
      %v482 = vrot.slane %v481, 1
      %v483 = vadd.f32 %v481, %v482
      %v484 = vsel %vm448, %v444, 0.0
      %v485 = vrot.slane %v484, 4
      %v486 = vadd.f32 %v484, %v485
      %v487 = vrot.slane %v486, 2
      %v488 = vadd.f32 %v486, %v487
      %v489 = vrot.slane %v488, 1
      %v490 = vadd.f32 %v488, %v489
      %v491 = vsel %vm448, %v445, 0.0
      %v492 = vrot.slane %v491, 4
      %v493 = vadd.f32 %v491, %v492
      %v494 = vrot.slane %v493, 2
      %v495 = vadd.f32 %v493, %v494
      %v496 = vrot.slane %v495, 1
      %v497 = vadd.f32 %v495, %v496
      %v498 = vsel %vm448, %v446, 0.0
      %v499 = vrot.slane %v498, 4
      %v500 = vadd.f32 %v498, %v499
      %v501 = vrot.slane %v500, 2
      %v502 = vadd.f32 %v500, %v501
      %v503 = vrot.slane %v502, 1
      %v504 = vadd.f32 %v502, %v503
      %v513 = vcombine.low %v455, %v462
      %v514 = vcombine.low %v469, %v476
      %v515 = vcombine.low %v483, %v490
      %v516 = vcombine.low %v497, %v504
      %v518 = vunpack.c.l.s4 1966171168
      %v519 = vunpack.c.0.s8 %v518
      %v520 = vlaneseq
      %v521 = vshrl.u32 %v520, 7
      %v522 = vsub.s32 %v519, %v521
      %v523 = vrot.slane %v513, %v522
      %v525 = vunpack.c.l.s4 1966171168
      %v526 = vunpack.c.0.s8 %v525
      %v527 = vlaneseq
      %v528 = vshrl.u32 %v527, 7
      %v529 = vsub.s32 %v526, %v528
      %v530 = vrot.slane %v514, %v529
      %v532 = vunpack.c.l.s4 1966171168
      %v533 = vunpack.c.0.s8 %v532
      %v534 = vlaneseq
      %v535 = vshrl.u32 %v534, 7
      %v536 = vsub.s32 %v533, %v535
      %v537 = vrot.slane %v515, %v536
      %v539 = vunpack.c.l.s4 1966171168
      %v540 = vunpack.c.0.s8 %v539
      %v541 = vlaneseq
      %v542 = vshrl.u32 %v541, 7
      %v543 = vsub.s32 %v540, %v542
      %v544 = vrot.slane %v516, %v543
      %v545 = vcombine.low %v523, %v530
      %v546 = vcombine.low %v537, %v544
      %v548 = vunpack.c.l.s4 1966171168
      %v549 = vunpack.c.0.s8 %v548
      %v550 = vlaneseq
      %v551 = vshrl.u32 %v550, 7
      %v552 = vsub.s32 %v549, %v551
      %v553 = vrot.slane %v545, %v552
      %v555 = vunpack.c.l.s4 1966171168
      %v556 = vunpack.c.0.s8 %v555
      %v557 = vlaneseq
      %v558 = vshrl.u32 %v557, 7
      %v559 = vsub.s32 %v556, %v558
      %v560 = vrot.slane %v546, %v559
      %v561 = vcombine.low %v553, %v560
      %v563 = vadd.f32 %v447, %v561
      %564 = vst [vmem:[#allocation2] sm:$0xff] %v563
      %v565 = vld [vmem:[#allocation3] sm:$0xff]
      %v574 = vcombine.low %v439, %v440
      %v575 = vcombine.low %v441, %v442
      %v577 = vunpack.c.l.s4 1983009808
      %v578 = vunpack.c.0.s8 %v577
      %v579 = vlaneseq
      %v580 = vshrl.u32 %v579, 7
      %v581 = vsub.s32 %v578, %v580
      %v582 = vrot.slane %v574, %v581
      %v584 = vunpack.c.l.s4 1983009808
      %v585 = vunpack.c.0.s8 %v584
      %v586 = vlaneseq
      %v587 = vshrl.u32 %v586, 7
      %v588 = vsub.s32 %v585, %v587
      %v589 = vrot.slane %v575, %v588
      %v590 = vcombine.low %v582, %v589
      %v591 = vcombine.low %v443, %v444
      %v592 = vcombine.low %v445, %v446
      %v594 = vunpack.c.l.s4 1983009808
      %v595 = vunpack.c.0.s8 %v594
      %v596 = vlaneseq
      %v597 = vshrl.u32 %v596, 7
      %v598 = vsub.s32 %v595, %v597
      %v599 = vrot.slane %v591, %v598
      %v601 = vunpack.c.l.s4 1983009808
      %v602 = vunpack.c.0.s8 %v601
      %v603 = vlaneseq
      %v604 = vshrl.u32 %v603, 7
      %v605 = vsub.s32 %v602, %v604
      %v606 = vrot.slane %v592, %v605
      %v607 = vcombine.low %v599, %v606
      %v610 = vsub.f32 %v48, %v590
      %v611 = vsub.f32 %v49, %v607
      %v614 = vcombine.high %v610, %v610
      %v616 = vunpack.c.l.s4 1983009808
      %v617 = vunpack.c.0.s8 %v616
      %v618 = vlaneseq
      %v619 = vshrl.u32 %v618, 7
      %v620 = vsub.s32 %v617, %v619
      %v621 = vrot.slane %v610, %v620
      %v623 = vunpack.c.l.s4 1983009808
      %v624 = vunpack.c.0.s8 %v623
      %v625 = vlaneseq
      %v626 = vshrl.u32 %v625, 7
      %v627 = vsub.s32 %v624, %v626
      %v628 = vrot.slane %v614, %v627
      %v629 = vcombine.high %v621, %v621
      %v630 = vcombine.high %v628, %v628
      %v631 = vcombine.high %v611, %v611
      %v633 = vunpack.c.l.s4 1983009808
      %v634 = vunpack.c.0.s8 %v633
      %v635 = vlaneseq
      %v636 = vshrl.u32 %v635, 7
      %v637 = vsub.s32 %v634, %v636
      %v638 = vrot.slane %v611, %v637
      %v640 = vunpack.c.l.s4 1983009808
      %v641 = vunpack.c.0.s8 %v640
      %v642 = vlaneseq
      %v643 = vshrl.u32 %v642, 7
      %v644 = vsub.s32 %v641, %v643
      %v645 = vrot.slane %v631, %v644
      %v646 = vcombine.high %v638, %v638
      %v647 = vcombine.high %v645, %v645
      %v656 = vsel %vm448, %v621, 0.0
      %v657 = vrot.slane %v656, 4
      %v658 = vadd.f32 %v656, %v657
      %v659 = vrot.slane %v658, 2
      %v660 = vadd.f32 %v658, %v659
      %v661 = vrot.slane %v660, 1
      %v662 = vadd.f32 %v660, %v661
      %v663 = vsel %vm448, %v629, 0.0
      %v664 = vrot.slane %v663, 4
      %v665 = vadd.f32 %v663, %v664
      %v666 = vrot.slane %v665, 2
      %v667 = vadd.f32 %v665, %v666
      %v668 = vrot.slane %v667, 1
      %v669 = vadd.f32 %v667, %v668
      %v670 = vsel %vm448, %v628, 0.0
      %v671 = vrot.slane %v670, 4
      %v672 = vadd.f32 %v670, %v671
      %v673 = vrot.slane %v672, 2
      %v674 = vadd.f32 %v672, %v673
      %v675 = vrot.slane %v674, 1
      %v676 = vadd.f32 %v674, %v675
      %v677 = vsel %vm448, %v630, 0.0
      %v678 = vrot.slane %v677, 4
      %v679 = vadd.f32 %v677, %v678
      %v680 = vrot.slane %v679, 2
      %v681 = vadd.f32 %v679, %v680
      %v682 = vrot.slane %v681, 1
      %v683 = vadd.f32 %v681, %v682
      %v684 = vsel %vm448, %v638, 0.0
      %v685 = vrot.slane %v684, 4
      %v686 = vadd.f32 %v684, %v685
      %v687 = vrot.slane %v686, 2
      %v688 = vadd.f32 %v686, %v687
      %v689 = vrot.slane %v688, 1
      %v690 = vadd.f32 %v688, %v689
      %v691 = vsel %vm448, %v646, 0.0
      %v692 = vrot.slane %v691, 4
      %v693 = vadd.f32 %v691, %v692
      %v694 = vrot.slane %v693, 2
      %v695 = vadd.f32 %v693, %v694
      %v696 = vrot.slane %v695, 1
      %v697 = vadd.f32 %v695, %v696
      %v698 = vsel %vm448, %v645, 0.0
      %v699 = vrot.slane %v698, 4
      %v700 = vadd.f32 %v698, %v699
      %v701 = vrot.slane %v700, 2
      %v702 = vadd.f32 %v700, %v701
      %v703 = vrot.slane %v702, 1
      %v704 = vadd.f32 %v702, %v703
      %v705 = vsel %vm448, %v647, 0.0
      %v706 = vrot.slane %v705, 4
      %v707 = vadd.f32 %v705, %v706
      %v708 = vrot.slane %v707, 2
      %v709 = vadd.f32 %v707, %v708
      %v710 = vrot.slane %v709, 1
      %v711 = vadd.f32 %v709, %v710
      %v720 = vcombine.low %v662, %v669
      %v721 = vcombine.low %v676, %v683
      %v722 = vcombine.low %v690, %v697
      %v723 = vcombine.low %v704, %v711
      %v725 = vunpack.c.l.s4 1966171168
      %v726 = vunpack.c.0.s8 %v725
      %v727 = vlaneseq
      %v728 = vshrl.u32 %v727, 7
      %v729 = vsub.s32 %v726, %v728
      %v730 = vrot.slane %v720, %v729
      %v732 = vunpack.c.l.s4 1966171168
      %v733 = vunpack.c.0.s8 %v732
      %v734 = vlaneseq
      %v735 = vshrl.u32 %v734, 7
      %v736 = vsub.s32 %v733, %v735
      %v737 = vrot.slane %v721, %v736
      %v739 = vunpack.c.l.s4 1966171168
      %v740 = vunpack.c.0.s8 %v739
      %v741 = vlaneseq
      %v742 = vshrl.u32 %v741, 7
      %v743 = vsub.s32 %v740, %v742
      %v744 = vrot.slane %v722, %v743
      %v746 = vunpack.c.l.s4 1966171168
      %v747 = vunpack.c.0.s8 %v746
      %v748 = vlaneseq
      %v749 = vshrl.u32 %v748, 7
      %v750 = vsub.s32 %v747, %v749
      %v751 = vrot.slane %v723, %v750
      %v752 = vcombine.low %v730, %v737
      %v753 = vcombine.low %v744, %v751
      %v755 = vunpack.c.l.s4 1966171168
      %v756 = vunpack.c.0.s8 %v755
      %v757 = vlaneseq
      %v758 = vshrl.u32 %v757, 7
      %v759 = vsub.s32 %v756, %v758
      %v760 = vrot.slane %v752, %v759
      %v762 = vunpack.c.l.s4 1966171168
      %v763 = vunpack.c.0.s8 %v762
      %v764 = vlaneseq
      %v765 = vshrl.u32 %v764, 7
      %v766 = vsub.s32 %v763, %v765
      %v767 = vrot.slane %v753, %v766
      %v768 = vcombine.low %v760, %v767
      %v770 = vadd.f32 %v565, %v768
      %771 = vst [vmem:[#allocation3] sm:$0xff] %v770
    $region33: #{tpu_custom_call.1} parent=1 // pred_fallthru
      _
    // Predicated region
    $region34: #{tpu_custom_call.1} parent=1 // pred_check
      %p772 = pneg %p36
    $region35: #{tpu_custom_call.1} parent=1 // pred_check_branch
      %774 = sbr.rel (%p772) target = $region37
    $region36: #{tpu_custom_call.1} parent=1 // pred_region
      %v775 = vld [vmem:[#allocation2] sm:$0xff]
      %v777 = vlaneseq
      %v778 = vshrl.u32 %v777, 7
      %v779 = vsub.s32 0, %v778
      %v780 = vrot.slane %v775, %v779
      %v781 = vlaneseq
      %v782 = vshrl.u32 %v781, 7
      %v783 = vsub.s32 1, %v782
      %v784 = vrot.slane %v775, %v783
      %v785 = vlaneseq
      %v786 = vshrl.u32 %v785, 7
      %v787 = vsub.s32 2, %v786
      %v788 = vrot.slane %v775, %v787
      %v789 = vlaneseq
      %v790 = vshrl.u32 %v789, 7
      %v791 = vsub.s32 3, %v790
      %v792 = vrot.slane %v775, %v791
      %v793 = vlaneseq
      %v794 = vshrl.u32 %v793, 7
      %v795 = vsub.s32 4, %v794
      %v796 = vrot.slane %v775, %v795
      %v797 = vlaneseq
      %v798 = vshrl.u32 %v797, 7
      %v799 = vsub.s32 5, %v798
      %v800 = vrot.slane %v775, %v799
      %v801 = vlaneseq
      %v802 = vshrl.u32 %v801, 7
      %v803 = vsub.s32 6, %v802
      %v804 = vrot.slane %v775, %v803
      %v805 = vlaneseq
      %v806 = vshrl.u32 %v805, 7
      %v807 = vsub.s32 7, %v806
      %v808 = vrot.slane %v775, %v807
      %vm817 = vcmask 1040384
      %v818 = vsel %vm817, %v780, 0.0
      %v819 = vsel %vm817, %v784, 0.0
      %v820 = vadd.f32 %v818, %v819
      %v821 = vsel %vm817, %v788, 0.0
      %v822 = vadd.f32 %v820, %v821
      %v823 = vsel %vm817, %v792, 0.0
      %v824 = vadd.f32 %v822, %v823
      %v825 = vsel %vm817, %v796, 0.0
      %v826 = vadd.f32 %v824, %v825
      %v827 = vsel %vm817, %v800, 0.0
      %v828 = vadd.f32 %v826, %v827
      %v829 = vsel %vm817, %v804, 0.0
      %v830 = vadd.f32 %v828, %v829
      %v831 = vsel %vm817, %v808, 0.0
      %v832 = vadd.f32 %v830, %v831
      %833 = vadd.xlane.f32.xlu0 %v832
      %v834 = vpop.xlane.xlu0 %833
      %v835 = vrot.slane %v834, 4
      %v836 = vadd.f32 %v834, %v835
      %v837 = vrot.slane %v836, 2
      %v838 = vadd.f32 %v836, %v837
      %v839 = vrot.slane %v838, 1
      %v840 = vadd.f32 %v838, %v839
      %s841 = vtos %v840
      %v842 = vld [vmem:[#allocation3] sm:$0xff]
      %v844 = vlaneseq
      %v845 = vshrl.u32 %v844, 7
      %v846 = vsub.s32 0, %v845
      %v847 = vrot.slane %v842, %v846
      %v848 = vlaneseq
      %v849 = vshrl.u32 %v848, 7
      %v850 = vsub.s32 1, %v849
      %v851 = vrot.slane %v842, %v850
      %v852 = vlaneseq
      %v853 = vshrl.u32 %v852, 7
      %v854 = vsub.s32 2, %v853
      %v855 = vrot.slane %v842, %v854
      %v856 = vlaneseq
      %v857 = vshrl.u32 %v856, 7
      %v858 = vsub.s32 3, %v857
      %v859 = vrot.slane %v842, %v858
      %v860 = vlaneseq
      %v861 = vshrl.u32 %v860, 7
      %v862 = vsub.s32 4, %v861
      %v863 = vrot.slane %v842, %v862
      %v864 = vlaneseq
      %v865 = vshrl.u32 %v864, 7
      %v866 = vsub.s32 5, %v865
      %v867 = vrot.slane %v842, %v866
      %v868 = vlaneseq
      %v869 = vshrl.u32 %v868, 7
      %v870 = vsub.s32 6, %v869
      %v871 = vrot.slane %v842, %v870
      %v872 = vlaneseq
      %v873 = vshrl.u32 %v872, 7
      %v874 = vsub.s32 7, %v873
      %v875 = vrot.slane %v842, %v874
      %v884 = vsel %vm817, %v847, 0.0
      %v885 = vsel %vm817, %v851, 0.0
      %v886 = vadd.f32 %v884, %v885
      %v887 = vsel %vm817, %v855, 0.0
      %v888 = vadd.f32 %v886, %v887
      %v889 = vsel %vm817, %v859, 0.0
      %v890 = vadd.f32 %v888, %v889
      %v891 = vsel %vm817, %v863, 0.0
      %v892 = vadd.f32 %v890, %v891
      %v893 = vsel %vm817, %v867, 0.0
      %v894 = vadd.f32 %v892, %v893
      %v895 = vsel %vm817, %v871, 0.0
      %v896 = vadd.f32 %v894, %v895
      %v897 = vsel %vm817, %v875, 0.0
      %v898 = vadd.f32 %v896, %v897
      %899 = vadd.xlane.f32.xlu0 %v898
      %v900 = vpop.xlane.xlu0 %899
      %v901 = vrot.slane %v900, 4
      %v902 = vadd.f32 %v900, %v901
      %v903 = vrot.slane %v902, 2
      %v904 = vadd.f32 %v902, %v903
      %v905 = vrot.slane %v904, 1
      %v906 = vadd.f32 %v904, %v905
      %s907 = vtos %v906
      %v908 = vlaneseq
      %v909 = vshrl.u32 %v908, 7
      %vm910 = vcmp.eq.s32.totalorder %v909, 0
      %vm911 = vcmp.eq.s32.totalorder %v909, 1
      %v912 = vstv %s907
      %v913 = vsel %vm911, %v912, 0.0
      %v914 = vstv %s841
      %v915 = vsel %vm910, %v914, %v913
      %916 = vst [vmem:[#allocation9] sm:$0xff] %v915
    $region37: #{tpu_custom_call.1} parent=1 // pred_fallthru
      _
    // Predicated region
    $region38: #{tpu_custom_call.1} parent=1 // pred_check
      _
    $region39: #{tpu_custom_call.1} parent=1 // pred_check_branch
      %918 = sbr.rel (0) target = $region41
    $region40: #{tpu_custom_call.1} parent=1 // pred_region
      %s920 = ssub.s32 128, 128
      %921 = vsyncadd [#allocation6], %s920
      %s923 = sshll.u32 [#allocation9], 4
      %s924 = int_to_ptr.vmem [resolvable:$true] %s923
      %926 = dma.vmem_to_hbm [thread:$0]  %s924, 128, %s2, [#allocation6]
    $region41: #{tpu_custom_call.1} parent=1 // pred_fallthru
      _
    // Predicated region
    $region42: #{tpu_custom_call.1} parent=1 // pred_check
      _
    $region43: #{tpu_custom_call.1} parent=1 // pred_check_branch
      %928 = sbr.rel (0) target = $region45
    $region44: #{tpu_custom_call.1} parent=1 // pred_region
      %929 = dma.done [#allocation6], 128
    $region45: #{tpu_custom_call.1} parent=1 // pred_fallthru
      _
    %930 = vsyncpa [#allocation5], 1
    %931 = vsyncpa [#allocation8], 1
    %932 = vsyncpa [#allocation6], 1

</llo_original>
